<compile_context>
chip_gen: v5e
topology: v5e:2x2
jax: 0.10.0
libtpu: 0.0.40
codegen_flags: <defaults>
</compile_context>

<pallas_src>
import math
from functools import partial

import jax
import jax.numpy as jnp
from jax.experimental import pallas as pl
from jax.experimental.pallas import tpu as pltpu


def _round_up(x: int, m: int) -> int:
    return ((x + m - 1) // m) * m


def _round_down(x: int, m: int) -> int:
    return (x // m) * m


# ---------------------------------------------------------------------------
# Prologue: xw = features @ W.T   (done once; small; output stored as bf16)
# ---------------------------------------------------------------------------
def _xw_kernel(feat_ref, wt_ref, xw_ref):
    xw_ref[...] = jnp.dot(
        feat_ref[...], wt_ref[...], preferred_element_type=jnp.float32
    ).astype(xw_ref.dtype)


# ---------------------------------------------------------------------------
# Main: out = adj @ xw + b, K-tiled over the contraction (neighbor) dimension.
# Accumulates directly into the f32 output block (resident across k).
# ---------------------------------------------------------------------------
def _make_agg_kernel(tk: int, xw_resident: bool):
    def kernel(adj_ref, xw_ref, b_ref, out_ref):
        k = pl.program_id(1)

        @pl.when(k == 0)
        def _init():
            out_ref[...] = jnp.broadcast_to(b_ref[...], out_ref.shape)

        if xw_resident:
            # xw is fully VMEM-resident; slice the K-tile for this step.
            start = pl.multiple_of(k * tk, 128)
            xw_tile = xw_ref[pl.ds(start, tk), :]
        else:
            xw_tile = xw_ref[...]

        # int8 (or bf16) adj tile -> bf16 for the MXU; f32 accumulation.
        out_ref[...] += jnp.dot(
            adj_ref[...].astype(xw_tile.dtype), xw_tile,
            preferred_element_type=jnp.float32,
        )

    return kernel


@partial(jax.jit, static_argnames=("tm", "tk", "assume_binary_adj"))
def dense_gcn_conv(adj, features, weight, bias, *, tm=512, tk=2048,
                   assume_binary_adj=True):
    """DenseGCNConv forward.

    adj:      [N, N]        dense adjacency
    features: [N, F_in]
    weight:   [F_out, F_in] (PyTorch nn.Linear layout)
    bias:     [F_out]
    returns:  [N, F_out] float32

    assume_binary_adj=True stores adj as int8 ({0,1} values are exact).
    Set False for non-binary (e.g. degree-normalized) adjacency; it then uses
    bf16 storage (~3 significant digits).
    """
    if tm <= 0 or tk <= 0 or tm % 128 or tk % 128:
        raise ValueError("tm and tk must be positive multiples of 128")

    N = adj.shape[0]
    f_in = features.shape[1]
    f_out = weight.shape[0]

    f32, bf16 = jnp.float32, jnp.bfloat16

    # Lane-dense padding for both feature dimensions.
    f_in_pad = _round_up(f_in, 128)
    f_out_pad = _round_up(f_out, 128)

    # Clamp tiles to the (128-padded) problem size.
    n128 = _round_up(N, 128)
    tm = min(tm, n128)
    tk = min(tk, n128)
    # Give the parallel M axis >= 2 row tiles whenever possible so v7x's two
    # TensorCores can both be used (megacore sharding of the "parallel" axis).
    if n128 >= 256:
        tm = min(tm, max(128, _round_down(n128 // 2, 128)))

    n_m = _round_up(N, tm)   # padded rows of adj / output
    n_k = _round_up(N, tk)   # padded contraction length

    # --- host/XLA prep (fused under jit; pads are no-ops when aligned) ------
    if assume_binary_adj:
        adj_q = adj.astype(jnp.int8)      # {0,1} exact; 1 B/elem HBM stream
    else:
        # TODO(synk): for normalized adjacency where full f32 precision is
        # required, keep adj in f32 here (at 2x the HBM traffic of bf16).
        adj_q = adj.astype(bf16)
    adj_p = jnp.pad(adj_q, ((0, n_m - N), (0, n_k - N)))
    feat_p = jnp.pad(features.astype(f32),
                     ((0, n_k - N), (0, f_in_pad - f_in)))
    wt_p = jnp.pad(weight.astype(f32).T,
                   ((0, f_in_pad - f_in), (0, f_out_pad - f_out)))
    bias_p = jnp.pad(bias.astype(f32).reshape(1, -1),
                     ((0, 0), (0, f_out_pad - f_out)))

    # --- prologue kernel: xw = features @ W.T (f32 compute, bf16 output) ----
    tmx = math.gcd(512, tk)   # multiple of 128, divides tk hence divides n_k
    pro_vmem = (tmx * f_in_pad * 4 * 2          # features tiles (dbl-buffered)
                + f_in_pad * f_out_pad * 4 * 2  # resident W^T
                + tmx * f_out_pad * 2 * 2       # bf16 output tiles
                + (4 << 20))
    pro_vmem = min(max(pro_vmem, 32 << 20), 56 << 20)

    xw = pl.pallas_call(
        _xw_kernel,
        out_shape=jax.ShapeDtypeStruct((n_k, f_out_pad), bf16),
        grid_spec=pltpu.PrefetchScalarGridSpec(
            num_scalar_prefetch=0,
            grid=(n_k // tmx,),
            in_specs=[
                pl.BlockSpec((tmx, f_in_pad), lambda i: (i, 0)),
                pl.BlockSpec((f_in_pad, f_out_pad), lambda i: (0, 0)),
            ],
            out_specs=pl.BlockSpec((tmx, f_out_pad), lambda i: (i, 0)),
        ),
        compiler_params=pltpu.CompilerParams(
            dimension_semantics=("parallel",),
            vmem_limit_bytes=pro_vmem),
    )(feat_p, wt_p)

    # --- main kernel: out = adj @ xw + b, K-tiled ----------------------------
    adj_itemsize = 1 if assume_binary_adj else 2
    # Keep xw fully VMEM-resident if its (conservatively double-buffered)
    # footprint is small; otherwise stream it per K-tile.
    xw_resident = (n_k * f_out_pad * 2 * 2) <= (16 << 20)

    if xw_resident:
        xw_spec = pl.BlockSpec((n_k, f_out_pad), lambda i, k: (0, 0))
    else:
        xw_spec = pl.BlockSpec((tk, f_out_pad), lambda i, k: (k, 0))

    agg_vmem = (tm * tk * adj_itemsize * 2                       # adj tiles
                + (n_k if xw_resident else tk) * f_out_pad * 2 * 2   # xw
                + tm * f_out_pad * 4 * 2                         # output
                + f_out_pad * 4 * 2                              # bias
                + (4 << 20))                                     # headroom
    agg_vmem = min(max(agg_vmem, 32 << 20), 56 << 20)  # < v7x 64 MiB physical

    out = pl.pallas_call(
        _make_agg_kernel(tk, xw_resident),
        out_shape=jax.ShapeDtypeStruct((n_m, f_out_pad), f32),
        grid_spec=pltpu.PrefetchScalarGridSpec(
            num_scalar_prefetch=0,
            grid=(n_m // tm, n_k // tk),
            in_specs=[
                pl.BlockSpec((tm, tk), lambda i, k: (i, k)),          # adj
                xw_spec,                                              # xw
                pl.BlockSpec((1, f_out_pad), lambda i, k: (0, 0)),    # bias
            ],
            out_specs=pl.BlockSpec((tm, f_out_pad), lambda i, k: (i, 0)),
        ),
        compiler_params=pltpu.CompilerParams(
            dimension_semantics=("parallel", "arbitrary"),
            vmem_limit_bytes=agg_vmem),
    )(adj_p, xw, bias_p)

    return out[:N, :f_out]


if __name__ == "__main__":
    # Small synthetic graph. N deliberately NOT a multiple of 128 to exercise
    # the padding path; default tiles clamp to tm=128 (2 row tiles -> both
    # TensorCores on v7x), tk=256, with xw fully VMEM-resident.
    N, F_IN, F_OUT = 200, 64, 32

    key = jax.random.PRNGKey(0)
    k_adj, k_feat, k_w, k_b = jax.random.split(key, 4)

    adj = (jax.random.uniform(k_adj, (N, N)) < 0.1).astype(jnp.float32)
    features = jax.random.normal(k_feat, (N, F_IN), dtype=jnp.float32)

    # nn.Linear-style init: U(-1/sqrt(in_feats), 1/sqrt(in_feats)).
    bound = 1.0 / (F_IN ** 0.5)
    weight = jax.random.uniform(k_w, (F_OUT, F_IN), minval=-bound, maxval=bound,
                                dtype=jnp.float32)
    bias = jax.random.uniform(k_b, (F_OUT,), minval=-bound, maxval=bound,
                              dtype=jnp.float32)

    out = dense_gcn_conv(adj, features, weight, bias)
    out = jax.block_until_ready(out)

    # Pure-JAX f32 reference of the original (un-reassociated) semantics.
    ref = (adj @ features) @ weight.T + bias
    assert out.shape == (N, F_OUT)
    # Tolerance accounts for bf16 MXU inputs / bf16 xw (f32 accumulation kept).
    assert jnp.allclose(out, ref, atol=5e-2, rtol=5e-2), "mismatch vs reference"

    print("KERNEL_OK")
</pallas_src>

<mosaic_0001>
module attributes {stable_mosaic.version = 11 : i64} {
  func.func @_xw_kernel(%arg0: i32, %arg1: memref<256x128xf32, #tpu.memory_space<vmem>>, %arg2: memref<128x128xf32, #tpu.memory_space<vmem>>, %arg3: memref<256x128xbf16, #tpu.memory_space<vmem>>) attributes {dimension_semantics = [#tpu.dimension_semantics<parallel>], iteration_bounds = array<i64: 1>, scalar_prefetch = 0 : i64, scratch_operands = 0 : i64, tpu.core_type = #tpu.core_type<tc>, window_params = [{transform_indices = @transform_0, window_bounds = array<i64: 256, 128>}, {pipeline_mode = #tpu.pipeline_mode<synchronous>, transform_indices = @transform_1, window_bounds = array<i64: 128, 128>}, {transform_indices = @transform_2, window_bounds = array<i64: 256, 128>}]} {
    %c0 = arith.constant 0 : index
    %c0_0 = arith.constant 0 : index
    %0 = vector.load %arg1[%c0, %c0_0] : memref<256x128xf32, #tpu.memory_space<vmem>>, vector<256x128xf32>
    %c0_1 = arith.constant 0 : index
    %c0_2 = arith.constant 0 : index
    %1 = vector.load %arg2[%c0_1, %c0_2] : memref<128x128xf32, #tpu.memory_space<vmem>>, vector<128x128xf32>
    %cst = arith.constant dense<0.000000e+00> : vector<256x128xf32>
    %2 = tpu.matmul %0, %1, %cst {dimension_numbers = #tpu.dot_dimension_numbers<[1], [0], [0], [1], [0, 0, 1, 1], [], []>} : vector<256x128xf32>, vector<128x128xf32>, vector<256x128xf32> -> vector<256x128xf32>
    %3 = arith.truncf %2 : vector<256x128xf32> to vector<256x128xbf16>
    %c0_3 = arith.constant 0 : index
    %c0_4 = arith.constant 0 : index
    %4 = vector.load %arg3[%c0_3, %c0_4] : memref<256x128xbf16, #tpu.memory_space<vmem>>, vector<256x128xbf16>
    tpu.vector_store %arg3[%c0_3, %c0_4], %3 {strides = array<i32>} : memref<256x128xbf16, #tpu.memory_space<vmem>>, vector<256x128xbf16>,
    return
  }
  func.func @transform_0(%arg0: i32) -> (i32, i32) {
    %c0_i32 = arith.constant 0 : i32
    %c0_i32_0 = arith.constant 0 : i32
    return %arg0, %c0_i32 : i32, i32
  }
  func.func @transform_1(%arg0: i32) -> (i32, i32) {
    %c0_i32 = arith.constant 0 : i32
    %c0_i32_0 = arith.constant 0 : i32
    %c0_i32_1 = arith.constant 0 : i32
    return %c0_i32, %c0_i32_0 : i32, i32
  }
  func.func @transform_2(%arg0: i32) -> (i32, i32) {
    %c0_i32 = arith.constant 0 : i32
    %c0_i32_0 = arith.constant 0 : i32
    return %arg0, %c0_i32 : i32, i32
  }
}

module attributes {stable_mosaic.version = 11 : i64} {
  func.func @kernel(%arg0: i32, %arg1: i32, %arg2: memref<128x256xi8, #tpu.memory_space<vmem>>, %arg3: memref<256x128xbf16, #tpu.memory_space<vmem>>, %arg4: memref<1x128xf32, #tpu.memory_space<vmem>>, %arg5: memref<128x128xf32, #tpu.memory_space<vmem>>) attributes {dimension_semantics = [#tpu.dimension_semantics<parallel>, #tpu.dimension_semantics<arbitrary>], iteration_bounds = array<i64: 2, 1>, scalar_prefetch = 0 : i64, scratch_operands = 0 : i64, tpu.core_type = #tpu.core_type<tc>, window_params = [{transform_indices = @transform_0, window_bounds = array<i64: 128, 256>}, {pipeline_mode = #tpu.pipeline_mode<synchronous>, transform_indices = @transform_1, window_bounds = array<i64: 256, 128>}, {pipeline_mode = #tpu.pipeline_mode<synchronous>, transform_indices = @transform_2, window_bounds = array<i64: 1, 128>}, {transform_indices = @transform_3, window_bounds = array<i64: 128, 128>}]} {
    %c0_i32 = arith.constant 0 : i32
    %0 = arith.cmpi eq, %arg1, %c0_i32 : i32
    %1 = arith.extui %0 : i1 to i32
    %c0_i32_0 = arith.constant 0 : i32
    %2 = arith.cmpi ne, %1, %c0_i32_0 : i32
    scf.if %2 {
      %c0_7 = arith.constant 0 : index
      %c0_8 = arith.constant 0 : index
      %13 = vector.load %arg4[%c0_7, %c0_8] : memref<1x128xf32, #tpu.memory_space<vmem>>, vector<1x128xf32>
      %14 = vector.shape_cast %13 : vector<1x128xf32> to vector<1x128xf32>
      %15 = vector.broadcast %14 : vector<1x128xf32> to vector<128x128xf32>
      %c0_9 = arith.constant 0 : index
      %c0_10 = arith.constant 0 : index
      %16 = vector.load %arg5[%c0_9, %c0_10] : memref<128x128xf32, #tpu.memory_space<vmem>>, vector<128x128xf32>
      tpu.vector_store %arg5[%c0_9, %c0_10], %15 {strides = array<i32>} : memref<128x128xf32, #tpu.memory_space<vmem>>, vector<128x128xf32>,
    } else {
    }
    %c256_i32 = arith.constant 256 : i32
    %3 = arith.muli %arg1, %c256_i32 : i32
    %4 = tpu.assume_multiple %3, 128 : i32
    %5 = arith.index_cast %4 : i32 to index
    %c0 = arith.constant 0 : index
    %6 = vector.load %arg3[%5, %c0] : memref<256x128xbf16, #tpu.memory_space<vmem>>, vector<256x128xbf16>
    %c0_1 = arith.constant 0 : index
    %c0_2 = arith.constant 0 : index
    %7 = vector.load %arg5[%c0_1, %c0_2] : memref<128x128xf32, #tpu.memory_space<vmem>>, vector<128x128xf32>
    %c0_3 = arith.constant 0 : index
    %c0_4 = arith.constant 0 : index
    %8 = vector.load %arg2[%c0_3, %c0_4] : memref<128x256xi8, #tpu.memory_space<vmem>>, vector<128x256xi8>
    %9 = arith.sitofp %8 : vector<128x256xi8> to vector<128x256xbf16>
    %cst = arith.constant dense<0.000000e+00> : vector<128x128xf32>
    %10 = tpu.matmul %9, %6, %cst {dimension_numbers = #tpu.dot_dimension_numbers<[1], [0], [0], [1], [0, 0, 1, 1], [], []>} : vector<128x256xbf16>, vector<256x128xbf16>, vector<128x128xf32> -> vector<128x128xf32>
    %11 = arith.addf %7, %10 : vector<128x128xf32>
    %c0_5 = arith.constant 0 : index
    %c0_6 = arith.constant 0 : index
    %12 = vector.load %arg5[%c0_5, %c0_6] : memref<128x128xf32, #tpu.memory_space<vmem>>, vector<128x128xf32>
    tpu.vector_store %arg5[%c0_5, %c0_6], %11 {strides = array<i32>} : memref<128x128xf32, #tpu.memory_space<vmem>>, vector<128x128xf32>,
    return
  }
  func.func @transform_0(%arg0: i32, %arg1: i32) -> (i32, i32) {
    %c0_i32 = arith.constant 0 : i32
    return %arg0, %arg1 : i32, i32
  }
  func.func @transform_1(%arg0: i32, %arg1: i32) -> (i32, i32) {
    %c0_i32 = arith.constant 0 : i32
    %c0_i32_0 = arith.constant 0 : i32
    %c0_i32_1 = arith.constant 0 : i32
    return %c0_i32, %c0_i32_0 : i32, i32
  }
  func.func @transform_2(%arg0: i32, %arg1: i32) -> (i32, i32) {
    %c0_i32 = arith.constant 0 : i32
    %c0_i32_0 = arith.constant 0 : i32
    %c0_i32_1 = arith.constant 0 : i32
    return %c0_i32, %c0_i32_0 : i32, i32
  }
  func.func @transform_3(%arg0: i32, %arg1: i32) -> (i32, i32) {
    %c0_i32 = arith.constant 0 : i32
    %c0_i32_0 = arith.constant 0 : i32
    return %arg0, %c0_i32 : i32, i32
  }
}

</mosaic_0001>

<llo_original>
// kernel: dense_gcn_conv.3
$region0: #{dense_gcn_conv.3}
  #allocation0 [shape = 'u32[]', space=smem, size = 0x4, offset = 0x4, fixed_abs, tag = 'smem constant byte address 0x4 - core index']
  #allocation1 [shape = 'u32[72,128]{1,0:T(1,128)}', space=vmem, size = 0x9000, scoped, tag = 'internal scratch']
  %s0 = inlined_call_operand.vmem [shape: s8[256,256], index: 0, kind: input, shape index: {}]
  %s1 = inlined_call_operand.vmem [shape: bf16[256,128], index: 1, kind: input, shape index: {}]
  %s2 = inlined_call_operand.vmem [shape: f32[1,128], index: 2, kind: input, shape index: {}]
  %s3 = inlined_call_operand.vmem [shape: f32[256,128], index: 3, kind: output, shape index: {}]
  %s4 = sld [smem:[#allocation0]]
  $region49: #{dense_gcn_conv.3} parent=0
    _
  %s6 = ssub.s32 1, %s4
  %s7 = scalar_select 0, %s6, %s4
  loop: start=0, step=1, limit=4
  $region2: #{dense_gcn_conv.3} parent=0 // loop_pre_header
    _
  $region3: #{dense_gcn_conv.3} parent=0 // loop_header
    %s9 = sphi 0, %s13
    %p10 = scmp.ge.s32.totalorder %s9, 4
    %s16 = sphi 0, %s28
    %s17 = sphi 0, %s24
    %s18 = sphi 0, %s16
    %s19 = sphi 0, %s17
    %s20 = sphi 0, %s18
    %s21 = sphi 0, %s19
    %s33 = sphi 0, %s35
    %s36 = sphi 0, %s33
    %s37 = sphi 0, %s36
    %s53 = sphi 0, %s37
    %s57 = sphi 0, %s57
    %s59 = sphi 0, %s57
    %s60 = sphi 0, %s59
    %s74 = sphi 0, %s60
    %s78 = sphi 0, %s78
    %s80 = sphi 0, %s78
    %s81 = sphi 0, %s80
    %s95 = sphi 0, %s81
    %s101 = sphi 0, %s103
    %s104 = sphi 0, %s101
    %s105 = sphi 0, %s104
    %s121 = sphi 0, %s105
  $region4: #{dense_gcn_conv.3} parent=0 // loop_header_branch
    %12 = sbr.rel (%p10) target = $region8
  $region5: #{dense_gcn_conv.3} parent=0 // loop_body
    %s14 = ssub.s32 %s9, 1
    %s15 = ssub.s32 %s9, 2
    %s22 = sadd.s32 1, %s17
    %p23 = scmp.ge.s32.totalorder %s22, 1
    %s24 = scalar_select %p23, 0, %s22
    %s25 = sadd.s32 1, %s16
    %s26 = scalar_select %p23, %s25, %s16
    %p27 = scmp.ge.s32.totalorder %s26, 2
    %s28 = scalar_select %p27, 0, %s26
    %s29 = ssub.s32 %s16, %s28
    %s30 = ssub.s32 %s17, %s24
    %s31 = sor.u32 %s29, %s30
    %p32 = scmp.eq.s32.totalorder %s31, 0
    %s34 = sadd.s32 %s33, 1
    %s35 = scalar_select %p32, %s33, %s34
    %p38 = pneg %p32
    %p39 = scmp.eq.s32.totalorder %s9, 1
    %p40 = por %p38, %p39
    %p41 = scmp.ne.s32.totalorder %s33, %s36
    %p42 = scmp.eq.s32.totalorder %s9, 0
    %p43 = por %p41, %p42
    %p44 = scmp.ne.s32.totalorder %s33, %s36
    %p45 = scmp.eq.s32.totalorder %s14, 1
    %p46 = por %p44, %p45
    %p47 = scmp.ne.s32.totalorder %s36, %s37
    %p48 = scmp.eq.s32.totalorder %s14, 0
    %p49 = por %p47, %p48
    %p50 = scmp.ne.s32.totalorder %s36, %s37
    %p51 = scmp.eq.s32.totalorder %s15, 1
    %p52 = por %p50, %p51
    %p54 = scmp.ne.s32.totalorder %s37, %s53
    %p55 = scmp.eq.s32.totalorder %s15, 0
    %p56 = por %p54, %p55
    %s58 = sadd.s32 %s57, 1
    %p61 = scmp.eq.s32.totalorder %s9, 1
    %p62 = scmp.ne.s32.totalorder %s57, %s59
    %p63 = scmp.eq.s32.totalorder %s9, 0
    %p64 = por %p62, %p63
    %p65 = scmp.ne.s32.totalorder %s57, %s59
    %p66 = scmp.eq.s32.totalorder %s14, 1
    %p67 = por %p65, %p66
    %p68 = scmp.ne.s32.totalorder %s59, %s60
    %p69 = scmp.eq.s32.totalorder %s14, 0
    %p70 = por %p68, %p69
    %p71 = scmp.ne.s32.totalorder %s59, %s60
    %p72 = scmp.eq.s32.totalorder %s15, 1
    %p73 = por %p71, %p72
    %p75 = scmp.ne.s32.totalorder %s60, %s74
    %p76 = scmp.eq.s32.totalorder %s15, 0
    %p77 = por %p75, %p76
    %s79 = sadd.s32 %s78, 1
    %p82 = scmp.eq.s32.totalorder %s9, 1
    %p83 = scmp.ne.s32.totalorder %s78, %s80
    %p84 = scmp.eq.s32.totalorder %s9, 0
    %p85 = por %p83, %p84
    %p86 = scmp.ne.s32.totalorder %s78, %s80
    %p87 = scmp.eq.s32.totalorder %s14, 1
    %p88 = por %p86, %p87
    %p89 = scmp.ne.s32.totalorder %s80, %s81
    %p90 = scmp.eq.s32.totalorder %s14, 0
    %p91 = por %p89, %p90
    %p92 = scmp.ne.s32.totalorder %s80, %s81
    %p93 = scmp.eq.s32.totalorder %s15, 1
    %p94 = por %p92, %p93
    %p96 = scmp.ne.s32.totalorder %s81, %s95
    %p97 = scmp.eq.s32.totalorder %s15, 0
    %p98 = por %p96, %p97
    %s99 = ssub.s32 %s16, %s28
    %p100 = scmp.eq.s32.totalorder %s99, 0
    %s102 = sadd.s32 %s101, 1
    %s103 = scalar_select %p100, %s101, %s102
    %p106 = pneg %p100
    %p107 = scmp.eq.s32.totalorder %s9, 1
    %p108 = por %p106, %p107
    %p109 = scmp.ne.s32.totalorder %s101, %s104
    %p110 = scmp.eq.s32.totalorder %s9, 0
    %p111 = por %p109, %p110
    %p112 = scmp.ne.s32.totalorder %s101, %s104
    %p113 = scmp.eq.s32.totalorder %s14, 1
    %p114 = por %p112, %p113
    %p115 = scmp.ne.s32.totalorder %s104, %s105
    %p116 = scmp.eq.s32.totalorder %s14, 0
    %p117 = por %p115, %p116
    %p118 = scmp.ne.s32.totalorder %s104, %s105
    %p119 = scmp.eq.s32.totalorder %s15, 1
    %p120 = por %p118, %p119
    %p122 = scmp.ne.s32.totalorder %s105, %s121
    %p123 = scmp.eq.s32.totalorder %s15, 0
    %p124 = por %p122, %p123
    %p125 = scmp.le.s32.totalorder 1, %s9
    %p126 = scmp.lt.s32.totalorder %s9, 3
    %p127 = pnand %p125, %p126
    %p128 = pneg %p127
    // Predicated region
    $region9: #{dense_gcn_conv.3} parent=5 // pred_check
      _
    $region10: #{dense_gcn_conv.3} parent=5 // pred_check_branch
      %130 = sbr.rel (%p127) target = $region12
    $region11: #{dense_gcn_conv.3} parent=5 // pred_region
      %s131 = ssub.s32 %s9, 1
      // Predicated region
      $region13: #{dense_gcn_conv.3} parent=11 // pred_check
        %p132 = pneg %p70
      $region14: #{dense_gcn_conv.3} parent=11 // pred_check_branch
        %134 = sbr.rel (%p132) target = $region16
      $region15: #{dense_gcn_conv.3} parent=11 // pred_region
        _
      $region16: #{dense_gcn_conv.3} parent=11 // pred_fallthru
        _
      // Predicated region
      $region17: #{dense_gcn_conv.3} parent=11 // pred_check
        %p135 = pneg %p91
      $region18: #{dense_gcn_conv.3} parent=11 // pred_check_branch
        %137 = sbr.rel (%p135) target = $region20
      $region19: #{dense_gcn_conv.3} parent=11 // pred_region
        _
      $region20: #{dense_gcn_conv.3} parent=11 // pred_fallthru
        _
    $region12: #{dense_gcn_conv.3} parent=5 // pred_fallthru
      _
    %p138 = scmp.lt.s32.totalorder %s9, 2
    // Predicated region
    $region21: #{dense_gcn_conv.3} parent=5 // pred_check
      %p139 = pneg %p138
    $region22: #{dense_gcn_conv.3} parent=5 // pred_check_branch
      %141 = sbr.rel (%p139) target = $region24
    $region23: #{dense_gcn_conv.3} parent=5 // pred_region
      // Predicated region
      $region25: #{dense_gcn_conv.3} parent=23 // pred_check
        %p142 = pneg %p43
      $region26: #{dense_gcn_conv.3} parent=23 // pred_check_branch
        %144 = sbr.rel (%p142) target = $region28
      $region27: #{dense_gcn_conv.3} parent=23 // pred_region
        %s145 = smul.u32 4, %s16
        %s146 = smul.u32 2, %s17
        %p147 = scmp.lt.s32.totalorder %s145, 7
        %s148 = scalar_select %p147, %s145, 7
        %p149 = scmp.lt.s32.totalorder %s146, 1
        %s150 = scalar_select %p149, %s146, 1
        %s151 = smul.addr %s148, 2
        %s152 = sadd.s32 %s150, %s151
        %s153 = smul.addr %s152, 8
        %s154 = scalar_lea.vmem %s0, %s153
        %s155 = smul.u32 4, %s16
        %s156 = smul.u32 2, %s17
      $region28: #{dense_gcn_conv.3} parent=23 // pred_fallthru
        _
    $region24: #{dense_gcn_conv.3} parent=5 // pred_fallthru
      _
    %p157 = scmp.le.s32.totalorder 1, %s9
    %p158 = scmp.lt.s32.totalorder %s9, 3
    %p159 = pnand %p157, %p158
    %p160 = pneg %p159
    // Predicated region
    $region29: #{dense_gcn_conv.3} parent=5 // pred_check
      _
    $region30: #{dense_gcn_conv.3} parent=5 // pred_check_branch
      %162 = sbr.rel (%p159) target = $region32
    $region31: #{dense_gcn_conv.3} parent=5 // pred_region
      %s163 = ssub.s32 %s9, 1
      %s164 = smul.u32 4, %s18
      %s165 = smul.u32 2, %s19
      %p166 = scmp.lt.s32.totalorder %s164, 7
      %s167 = scalar_select %p166, %s164, 7
      %p168 = scmp.lt.s32.totalorder %s165, 1
      %s169 = scalar_select %p168, %s165, 1
      %s170 = smul.addr %s167, 2
      %s171 = sadd.s32 %s169, %s170
      %s172 = smul.addr %s171, 8
      %s173 = scalar_lea.vmem %s0, %s172
      %p174 = pneg %p49
      %p175 = pneg %p46
      %p176 = pneg %p70
      %p177 = pneg %p67
      %p178 = pneg %p91
      %p179 = pneg %p88
      %p180 = pneg %p117
      %p181 = pneg %p114
      %s182 = smul.u32 16, %s18
      %p183 = scmp.lt.s32.totalorder %s182, 31
      %s184 = scalar_select %p183, %s182, 31
      %s185 = smul.addr %s184, 8
      %s186 = scalar_lea.vmem %s3, %s185
      %s187 = smul.u32 4, %s18
      %s188 = smul.u32 2, %s19
      %p189 = scmp.lt.s32.totalorder %s187, 7
      %s190 = scalar_select %p189, %s187, 7
      %p191 = scmp.lt.s32.totalorder %s188, 1
      %s192 = scalar_select %p191, %s188, 1
      %s193 = smul.addr %s190, 2
      %s194 = sadd.s32 %s192, %s193
      %s195 = smul.addr %s194, 8
      %s196 = scalar_lea.vmem %s0, %s195
      %s197 = smul.u32 4, %s18
      %s198 = smul.u32 2, %s19
      %s199 = smul.u32 16, %s18
      %p200 = scmp.lt.s32.totalorder %s199, 31
      %s201 = scalar_select %p200, %s199, 31
      %s202 = smul.addr %s201, 8
      %s203 = scalar_lea.vmem %s3, %s202
      %s204 = smul.u32 16, %s18
      %p205 = scmp.eq.s32.totalorder %s19, 0
      // Predicated region
      $region33: #{dense_gcn_conv.3} parent=31 // pred_check
        %p206 = pneg %p205
      $region34: #{dense_gcn_conv.3} parent=31 // pred_check_branch
        %208 = sbr.rel (%p206) target = $region36
      $region35: #{dense_gcn_conv.3} parent=31 // pred_region
        %v209 = vld [vmem:[%s2] sm:$0x1]
        %v211 = vperm.slane %v209, 0
        %213 = vst [vmem:[%s203] sm:$0xff] %v211
        %214 = vst [vmem:[%s203 + $0x8] sm:$0xff] %v211
        %215 = vst [vmem:[%s203 + $0x10] sm:$0xff] %v211
        %216 = vst [vmem:[%s203 + $0x18] sm:$0xff] %v211
        %217 = vst [vmem:[%s203 + $0x20] sm:$0xff] %v211
        %218 = vst [vmem:[%s203 + $0x28] sm:$0xff] %v211
        %219 = vst [vmem:[%s203 + $0x30] sm:$0xff] %v211
        %220 = vst [vmem:[%s203 + $0x38] sm:$0xff] %v211
        %221 = vst [vmem:[%s203 + $0x40] sm:$0xff] %v211
        %222 = vst [vmem:[%s203 + $0x48] sm:$0xff] %v211
        %223 = vst [vmem:[%s203 + $0x50] sm:$0xff] %v211
        %224 = vst [vmem:[%s203 + $0x58] sm:$0xff] %v211
        %225 = vst [vmem:[%s203 + $0x60] sm:$0xff] %v211
        %226 = vst [vmem:[%s203 + $0x68] sm:$0xff] %v211
        %227 = vst [vmem:[%s203 + $0x70] sm:$0xff] %v211
        %228 = vst [vmem:[%s203 + $0x78] sm:$0xff] %v211
      $region36: #{dense_gcn_conv.3} parent=31 // pred_fallthru
        _
      %s229 = smul.u32 %s19, 256
      %s230 = sshra.s32 %s229, 3
      %s231 = sand.u32 %s229, 7
      %s232 = smul.addr %s230, 4
      %s233 = scalar_lea.vmem %s1, %s232
      %v234 = vld [vmem:[%s233] sm:$0xf]
      %v235 = vld [vmem:[%s233 + $0x4] sm:$0xf]
      %v236 = vld [vmem:[%s233 + $0x8] sm:$0xf]
      %v237 = vld [vmem:[%s233 + $0xc] sm:$0xf]
      %v238 = vld [vmem:[%s233 + $0x10] sm:$0xf]
      %v239 = vld [vmem:[%s233 + $0x14] sm:$0xf]
      %v240 = vld [vmem:[%s233 + $0x18] sm:$0xf]
      %v241 = vld [vmem:[%s233 + $0x1c] sm:$0xf]
      %v242 = vld [vmem:[%s233 + $0x20] sm:$0xf]
      %v243 = vld [vmem:[%s233 + $0x24] sm:$0xf]
      %v244 = vld [vmem:[%s233 + $0x28] sm:$0xf]
      %v245 = vld [vmem:[%s233 + $0x2c] sm:$0xf]
      %v246 = vld [vmem:[%s233 + $0x30] sm:$0xf]
      %v247 = vld [vmem:[%s233 + $0x34] sm:$0xf]
      %v248 = vld [vmem:[%s233 + $0x38] sm:$0xf]
      %v249 = vld [vmem:[%s233 + $0x3c] sm:$0xf]
      %v250 = vld [vmem:[%s233 + $0x40] sm:$0xf]
      %v251 = vld [vmem:[%s233 + $0x44] sm:$0xf]
      %v252 = vld [vmem:[%s233 + $0x48] sm:$0xf]
      %v253 = vld [vmem:[%s233 + $0x4c] sm:$0xf]
      %v254 = vld [vmem:[%s233 + $0x50] sm:$0xf]
      %v255 = vld [vmem:[%s233 + $0x54] sm:$0xf]
      %v256 = vld [vmem:[%s233 + $0x58] sm:$0xf]
      %v257 = vld [vmem:[%s233 + $0x5c] sm:$0xf]
      %v258 = vld [vmem:[%s233 + $0x60] sm:$0xf]
      %v259 = vld [vmem:[%s233 + $0x64] sm:$0xf]
      %v260 = vld [vmem:[%s233 + $0x68] sm:$0xf]
      %v261 = vld [vmem:[%s233 + $0x6c] sm:$0xf]
      %v262 = vld [vmem:[%s233 + $0x70] sm:$0xf]
      %v263 = vld [vmem:[%s233 + $0x74] sm:$0xf]
      %v264 = vld [vmem:[%s233 + $0x78] sm:$0xf]
      %v265 = vld [vmem:[%s233 + $0x7c] sm:$0xf]
      %v266 = vld [vmem:[%s203] sm:$0xff]
      %v267 = vld [vmem:[%s203 + $0x8] sm:$0xff]
      %v268 = vld [vmem:[%s203 + $0x10] sm:$0xff]
      %v269 = vld [vmem:[%s203 + $0x18] sm:$0xff]
      %v270 = vld [vmem:[%s203 + $0x20] sm:$0xff]
      %v271 = vld [vmem:[%s203 + $0x28] sm:$0xff]
      %v272 = vld [vmem:[%s203 + $0x30] sm:$0xff]
      %v273 = vld [vmem:[%s203 + $0x38] sm:$0xff]
      %v274 = vld [vmem:[%s203 + $0x40] sm:$0xff]
      %v275 = vld [vmem:[%s203 + $0x48] sm:$0xff]
      %v276 = vld [vmem:[%s203 + $0x50] sm:$0xff]
      %v277 = vld [vmem:[%s203 + $0x58] sm:$0xff]
      %v278 = vld [vmem:[%s203 + $0x60] sm:$0xff]
      %v279 = vld [vmem:[%s203 + $0x68] sm:$0xff]
      %v280 = vld [vmem:[%s203 + $0x70] sm:$0xff]
      %v281 = vld [vmem:[%s203 + $0x78] sm:$0xff]
      %v282 = vld [vmem:[%s196] sm:$0xff]
      %v283 = vld [vmem:[%s196 + $0x8] sm:$0xff]
      %v284 = vld [vmem:[%s196 + $0x10] sm:$0xff]
      %v285 = vld [vmem:[%s196 + $0x18] sm:$0xff]
      %v286 = vld [vmem:[%s196 + $0x20] sm:$0xff]
      %v287 = vld [vmem:[%s196 + $0x28] sm:$0xff]
      %v288 = vld [vmem:[%s196 + $0x30] sm:$0xff]
      %v289 = vld [vmem:[%s196 + $0x38] sm:$0xff]
      %v290 = vunpack.c.0.s8 %v282
      %v291 = vunpack.c.0.s8 %v283
      %v292 = vunpack.c.1.s8 %v282
      %v293 = vunpack.c.1.s8 %v283
      %v294 = vunpack.c.2.s8 %v282
      %v295 = vunpack.c.2.s8 %v283
      %v296 = vunpack.c.3.s8 %v282
      %v297 = vunpack.c.3.s8 %v283
      %v298 = vunpack.c.0.s8 %v284
      %v299 = vunpack.c.0.s8 %v285
      %v300 = vunpack.c.1.s8 %v284
      %v301 = vunpack.c.1.s8 %v285
      %v302 = vunpack.c.2.s8 %v284
      %v303 = vunpack.c.2.s8 %v285
      %v304 = vunpack.c.3.s8 %v284
      %v305 = vunpack.c.3.s8 %v285
      %v306 = vunpack.c.0.s8 %v286
      %v307 = vunpack.c.0.s8 %v287
      %v308 = vunpack.c.1.s8 %v286
      %v309 = vunpack.c.1.s8 %v287
      %v310 = vunpack.c.2.s8 %v286
      %v311 = vunpack.c.2.s8 %v287
      %v312 = vunpack.c.3.s8 %v286
      %v313 = vunpack.c.3.s8 %v287
      %v314 = vunpack.c.0.s8 %v288
      %v315 = vunpack.c.0.s8 %v289
      %v316 = vunpack.c.1.s8 %v288
      %v317 = vunpack.c.1.s8 %v289
      %v318 = vunpack.c.2.s8 %v288
      %v319 = vunpack.c.2.s8 %v289
      %v320 = vunpack.c.3.s8 %v288
      %v321 = vunpack.c.3.s8 %v289
      %v322 = vcvt.s32.f32 %v290
      %v323 = vcvt.s32.f32 %v291
      %v324 = vcvt.s32.f32 %v292
      %v325 = vcvt.s32.f32 %v293
      %v326 = vcvt.s32.f32 %v294
      %v327 = vcvt.s32.f32 %v295
      %v328 = vcvt.s32.f32 %v296
      %v329 = vcvt.s32.f32 %v297
      %v330 = vcvt.s32.f32 %v298
      %v331 = vcvt.s32.f32 %v299
      %v332 = vcvt.s32.f32 %v300
      %v333 = vcvt.s32.f32 %v301
      %v334 = vcvt.s32.f32 %v302
      %v335 = vcvt.s32.f32 %v303
      %v336 = vcvt.s32.f32 %v304
      %v337 = vcvt.s32.f32 %v305
      %v338 = vcvt.s32.f32 %v306
      %v339 = vcvt.s32.f32 %v307
      %v340 = vcvt.s32.f32 %v308
      %v341 = vcvt.s32.f32 %v309
      %v342 = vcvt.s32.f32 %v310
      %v343 = vcvt.s32.f32 %v311
      %v344 = vcvt.s32.f32 %v312
      %v345 = vcvt.s32.f32 %v313
      %v346 = vcvt.s32.f32 %v314
      %v347 = vcvt.s32.f32 %v315
      %v348 = vcvt.s32.f32 %v316
      %v349 = vcvt.s32.f32 %v317
      %v350 = vcvt.s32.f32 %v318
      %v351 = vcvt.s32.f32 %v319
      %v352 = vcvt.s32.f32 %v320
      %v353 = vcvt.s32.f32 %v321
      %v354 = vpack.c.bf16 %v324, %v322
      %v355 = vpack.c.bf16 %v325, %v323
      %v356 = vpack.c.bf16 %v328, %v326
      %v357 = vpack.c.bf16 %v329, %v327
      %v358 = vpack.c.bf16 %v332, %v330
      %v359 = vpack.c.bf16 %v333, %v331
      %v360 = vpack.c.bf16 %v336, %v334
      %v361 = vpack.c.bf16 %v337, %v335
      %v362 = vpack.c.bf16 %v340, %v338
      %v363 = vpack.c.bf16 %v341, %v339
      %v364 = vpack.c.bf16 %v344, %v342
      %v365 = vpack.c.bf16 %v345, %v343
      %v366 = vpack.c.bf16 %v348, %v346
      %v367 = vpack.c.bf16 %v349, %v347
      %v368 = vpack.c.bf16 %v352, %v350
      %v369 = vpack.c.bf16 %v353, %v351
      %v402 = vunpack.c.l.b16 %v234
      %v403 = vunpack.c.l.b16 %v235
      %v404 = vunpack.c.l.b16 %v236
      %v405 = vunpack.c.l.b16 %v237
      %v406 = vunpack.c.l.b16 %v238
      %v407 = vunpack.c.l.b16 %v239
      %v408 = vunpack.c.l.b16 %v240
      %v409 = vunpack.c.l.b16 %v241
      %v410 = vunpack.c.l.b16 %v242
      %v411 = vunpack.c.l.b16 %v243
      %v412 = vunpack.c.l.b16 %v244
      %v413 = vunpack.c.l.b16 %v245
      %v414 = vunpack.c.l.b16 %v246
      %v415 = vunpack.c.l.b16 %v247
      %v416 = vunpack.c.l.b16 %v248
      %v417 = vunpack.c.l.b16 %v249
      %v418 = vunpack.c.l.b16 %v250
      %v419 = vunpack.c.l.b16 %v251
      %v420 = vunpack.c.l.b16 %v252
      %v421 = vunpack.c.l.b16 %v253
      %v422 = vunpack.c.l.b16 %v254
      %v423 = vunpack.c.l.b16 %v255
      %v424 = vunpack.c.l.b16 %v256
      %v425 = vunpack.c.l.b16 %v257
      %v426 = vunpack.c.l.b16 %v258
      %v427 = vunpack.c.l.b16 %v259
      %v428 = vunpack.c.l.b16 %v260
      %v429 = vunpack.c.l.b16 %v261
      %v430 = vunpack.c.l.b16 %v262
      %v431 = vunpack.c.l.b16 %v263
      %v432 = vunpack.c.l.b16 %v264
      %v433 = vunpack.c.l.b16 %v265
      %v434 = vpack.c.b16 %v403, %v402
      %v435 = vpack.c.b16 %v405, %v404
      %v436 = vpack.c.b16 %v407, %v406
      %v437 = vpack.c.b16 %v409, %v408
      %v438 = vpack.c.b16 %v411, %v410
      %v439 = vpack.c.b16 %v413, %v412
      %v440 = vpack.c.b16 %v415, %v414
      %v441 = vpack.c.b16 %v417, %v416
      %v442 = vpack.c.b16 %v419, %v418
      %v443 = vpack.c.b16 %v421, %v420
      %v444 = vpack.c.b16 %v423, %v422
      %v445 = vpack.c.b16 %v425, %v424
      %v446 = vpack.c.b16 %v427, %v426
      %v447 = vpack.c.b16 %v429, %v428
      %v448 = vpack.c.b16 %v431, %v430
      %v449 = vpack.c.b16 %v433, %v432
      %466 = vmatpush.bf16.msra.mxu0 %v441
      %467 = vmatpush.bf16.msra.mxu0 %v440
      %468 = vmatpush.bf16.msra.mxu0 %v439
      %469 = vmatpush.bf16.msra.mxu0 %v438
      %470 = vmatpush.bf16.msra.mxu0 %v437
      %471 = vmatpush.bf16.msra.mxu0 %v436
      %472 = vmatpush.bf16.msra.mxu0 %v435
      %473 = vmatpush.bf16.msra.mxu0 %v434
      %474 = vmatmul.bf16.gmra.mxu0 %v354
      %v475 = vpop.f32.mrf.mxu0
      %v476 = vadd.f32 0.0, %v475
      %v477 = vpop.f32.mrf.mxu0
      %v478 = vadd.f32 0.0, %v477
      %479 = vmatmul.bf16.gmra.mxu0 %v356
      %v480 = vpop.f32.mrf.mxu0
      %v481 = vadd.f32 0.0, %v480
      %v482 = vpop.f32.mrf.mxu0
      %v483 = vadd.f32 0.0, %v482
      %484 = vmatmul.bf16.gmra.mxu0 %v358
      %v485 = vpop.f32.mrf.mxu0
      %v486 = vadd.f32 0.0, %v485
      %v487 = vpop.f32.mrf.mxu0
      %v488 = vadd.f32 0.0, %v487
      %489 = vmatmul.bf16.gmra.mxu0 %v360
      %v490 = vpop.f32.mrf.mxu0
      %v491 = vadd.f32 0.0, %v490
      %v492 = vpop.f32.mrf.mxu0
      %v493 = vadd.f32 0.0, %v492
      %494 = vmatmul.bf16.gmra.mxu0 %v362
      %v495 = vpop.f32.mrf.mxu0
      %v496 = vadd.f32 0.0, %v495
      %v497 = vpop.f32.mrf.mxu0
      %v498 = vadd.f32 0.0, %v497
      %499 = vmatmul.bf16.gmra.mxu0 %v364
      %v500 = vpop.f32.mrf.mxu0
      %v501 = vadd.f32 0.0, %v500
      %v502 = vpop.f32.mrf.mxu0
      %v503 = vadd.f32 0.0, %v502
      %504 = vmatmul.bf16.gmra.mxu0 %v366
      %v505 = vpop.f32.mrf.mxu0
      %v506 = vadd.f32 0.0, %v505
      %v507 = vpop.f32.mrf.mxu0
      %v508 = vadd.f32 0.0, %v507
      %509 = vmatmul.bf16.gmra.mxu0 %v368
      %v510 = vpop.f32.mrf.mxu0
      %v511 = vadd.f32 0.0, %v510
      %v512 = vpop.f32.mrf.mxu0
      %v513 = vadd.f32 0.0, %v512
      %514 = vdwg.mxu0
      %515 = vmatpush.bf16.msra.mxu0 %v449
      %516 = vmatpush.bf16.msra.mxu0 %v448
      %517 = vmatpush.bf16.msra.mxu0 %v447
      %518 = vmatpush.bf16.msra.mxu0 %v446
      %519 = vmatpush.bf16.msra.mxu0 %v445
      %520 = vmatpush.bf16.msra.mxu0 %v444
      %521 = vmatpush.bf16.msra.mxu0 %v443
      %522 = vmatpush.bf16.msra.mxu0 %v442
      %523 = vmatmul.bf16.gmra.mxu0 %v355
      %v524 = vpop.f32.mrf.mxu0
      %v525 = vadd.f32 %v476, %v524
      %v526 = vpop.f32.mrf.mxu0
      %v527 = vadd.f32 %v478, %v526
      %528 = vmatmul.bf16.gmra.mxu0 %v357
      %v529 = vpop.f32.mrf.mxu0
      %v530 = vadd.f32 %v481, %v529
      %v531 = vpop.f32.mrf.mxu0
      %v532 = vadd.f32 %v483, %v531
      %533 = vmatmul.bf16.gmra.mxu0 %v359
      %v534 = vpop.f32.mrf.mxu0
      %v535 = vadd.f32 %v486, %v534
      %v536 = vpop.f32.mrf.mxu0
      %v537 = vadd.f32 %v488, %v536
      %538 = vmatmul.bf16.gmra.mxu0 %v361
      %v539 = vpop.f32.mrf.mxu0
      %v540 = vadd.f32 %v491, %v539
      %v541 = vpop.f32.mrf.mxu0
      %v542 = vadd.f32 %v493, %v541
      %543 = vmatmul.bf16.gmra.mxu0 %v363
      %v544 = vpop.f32.mrf.mxu0
      %v545 = vadd.f32 %v496, %v544
      %v546 = vpop.f32.mrf.mxu0
      %v547 = vadd.f32 %v498, %v546
      %548 = vmatmul.bf16.gmra.mxu0 %v365
      %v549 = vpop.f32.mrf.mxu0
      %v550 = vadd.f32 %v501, %v549
      %v551 = vpop.f32.mrf.mxu0
      %v552 = vadd.f32 %v503, %v551
      %553 = vmatmul.bf16.gmra.mxu0 %v367
      %v554 = vpop.f32.mrf.mxu0
      %v555 = vadd.f32 %v506, %v554
      %v556 = vpop.f32.mrf.mxu0
      %v557 = vadd.f32 %v508, %v556
      %558 = vmatmul.bf16.gmra.mxu0 %v369
      %v559 = vpop.f32.mrf.mxu0
      %v560 = vadd.f32 %v511, %v559
      %v561 = vpop.f32.mrf.mxu0
      %v562 = vadd.f32 %v513, %v561
      %563 = vdwg.mxu0
      %v564 = vadd.f32 %v266, %v525
      %v565 = vadd.f32 %v267, %v527
      %v566 = vadd.f32 %v268, %v530
      %v567 = vadd.f32 %v269, %v532
      %v568 = vadd.f32 %v270, %v535
      %v569 = vadd.f32 %v271, %v537
      %v570 = vadd.f32 %v272, %v540
      %v571 = vadd.f32 %v273, %v542
      %v572 = vadd.f32 %v274, %v545
      %v573 = vadd.f32 %v275, %v547
      %v574 = vadd.f32 %v276, %v550
      %v575 = vadd.f32 %v277, %v552
      %v576 = vadd.f32 %v278, %v555
      %v577 = vadd.f32 %v279, %v557
      %v578 = vadd.f32 %v280, %v560
      %v579 = vadd.f32 %v281, %v562
      %580 = vst [vmem:[%s203] sm:$0xff] %v564
      %581 = vst [vmem:[%s203 + $0x8] sm:$0xff] %v565
      %582 = vst [vmem:[%s203 + $0x10] sm:$0xff] %v566
      %583 = vst [vmem:[%s203 + $0x18] sm:$0xff] %v567
      %584 = vst [vmem:[%s203 + $0x20] sm:$0xff] %v568
      %585 = vst [vmem:[%s203 + $0x28] sm:$0xff] %v569
      %586 = vst [vmem:[%s203 + $0x30] sm:$0xff] %v570
      %587 = vst [vmem:[%s203 + $0x38] sm:$0xff] %v571
      %588 = vst [vmem:[%s203 + $0x40] sm:$0xff] %v572
      %589 = vst [vmem:[%s203 + $0x48] sm:$0xff] %v573
      %590 = vst [vmem:[%s203 + $0x50] sm:$0xff] %v574
      %591 = vst [vmem:[%s203 + $0x58] sm:$0xff] %v575
      %592 = vst [vmem:[%s203 + $0x60] sm:$0xff] %v576
      %593 = vst [vmem:[%s203 + $0x68] sm:$0xff] %v577
      %594 = vst [vmem:[%s203 + $0x70] sm:$0xff] %v578
      %595 = vst [vmem:[%s203 + $0x78] sm:$0xff] %v579
      %s596 = smul.u32 16, %s18
      %p597 = scmp.lt.s32.totalorder %s596, 31
      %s598 = scalar_select %p597, %s596, 31
      %s599 = smul.addr %s598, 8
      %s600 = scalar_lea.vmem %s3, %s599
      // Predicated region
      $region37: #{dense_gcn_conv.3} parent=31 // pred_check
        %p601 = pneg %p114
      $region38: #{dense_gcn_conv.3} parent=31 // pred_check_branch
        %603 = sbr.rel (%p601) target = $region40
      $region39: #{dense_gcn_conv.3} parent=31 // pred_region
        %s604 = smul.u32 16, %s18
      $region40: #{dense_gcn_conv.3} parent=31 // pred_fallthru
        _
    $region32: #{dense_gcn_conv.3} parent=5 // pred_fallthru
      _
    %p605 = scmp.le.s32.totalorder 2, %s9
    // Predicated region
    $region41: #{dense_gcn_conv.3} parent=5 // pred_check
      %p606 = pneg %p605
    $region42: #{dense_gcn_conv.3} parent=5 // pred_check_branch
      %608 = sbr.rel (%p606) target = $region44
    $region43: #{dense_gcn_conv.3} parent=5 // pred_region
      %s609 = ssub.s32 %s9, 2
      // Predicated region
      $region45: #{dense_gcn_conv.3} parent=43 // pred_check
        %p610 = pneg %p120
      $region46: #{dense_gcn_conv.3} parent=43 // pred_check_branch
        %612 = sbr.rel (%p610) target = $region48
      $region47: #{dense_gcn_conv.3} parent=43 // pred_region
        %s613 = smul.u32 16, %s20
        %p614 = scmp.lt.s32.totalorder %s613, 31
        %s615 = scalar_select %p614, %s613, 31
        %s616 = smul.addr %s615, 8
        %s617 = scalar_lea.vmem %s3, %s616
      $region48: #{dense_gcn_conv.3} parent=43 // pred_fallthru
        _
    $region44: #{dense_gcn_conv.3} parent=5 // pred_fallthru
      _
  $region6: #{dense_gcn_conv.3} parent=0 // loop_footer
    %s13 = sadd.s32 1, %s9
  $region7: #{dense_gcn_conv.3} parent=0 // loop_footer_branch
    %8 = sbr.rel target = $region3
  $region8: #{dense_gcn_conv.3} parent=0 // loop_exit
    _

// kernel: dense_gcn_conv.2
$region0: #{dense_gcn_conv.2}
  #allocation0 [shape = 'u32[]', space=smem, size = 0x4, offset = 0x4, fixed_abs, tag = 'smem constant byte address 0x4 - core index']
  #allocation1 [shape = 'u32[72,128]{1,0:T(1,128)}', space=vmem, size = 0x9000, scoped, tag = 'internal scratch']
  %s0 = inlined_call_operand.vmem [shape: f32[256,128], index: 0, kind: input, shape index: {}]
  %s1 = inlined_call_operand.vmem [shape: f32[128,128], index: 1, kind: input, shape index: {}]
  %s2 = inlined_call_operand.vmem [shape: bf16[256,128], index: 2, kind: output, shape index: {}]
  %s3 = sld [smem:[#allocation0]]
  $region18: #{dense_gcn_conv.2} parent=0
    _
  %s5 = ssub.s32 1, %s3
  %s6 = scalar_select 0, %s5, %s3
  // Predicated region
  $region2: #{dense_gcn_conv.2} parent=0 // pred_check
    _
  $region3: #{dense_gcn_conv.2} parent=0 // pred_check_branch
    %8 = sbr.rel (0) target = $region5
  $region4: #{dense_gcn_conv.2} parent=0 // pred_region
    _
  $region5: #{dense_gcn_conv.2} parent=0 // pred_fallthru
    _
  // Predicated region
  $region6: #{dense_gcn_conv.2} parent=0 // pred_check
    _
  $region7: #{dense_gcn_conv.2} parent=0 // pred_check_branch
    %10 = sbr.rel (0) target = $region9
  $region8: #{dense_gcn_conv.2} parent=0 // pred_region
    _
  $region9: #{dense_gcn_conv.2} parent=0 // pred_fallthru
    _
  %v11 = vld [vmem:[%s0] sm:$0xff]
  %v12 = vld [vmem:[%s0 + $0x8] sm:$0xff]
  %v13 = vld [vmem:[%s0 + $0x10] sm:$0xff]
  %v14 = vld [vmem:[%s0 + $0x18] sm:$0xff]
  %v15 = vld [vmem:[%s0 + $0x20] sm:$0xff]
  %v16 = vld [vmem:[%s0 + $0x28] sm:$0xff]
  %v17 = vld [vmem:[%s0 + $0x30] sm:$0xff]
  %v18 = vld [vmem:[%s0 + $0x38] sm:$0xff]
  %v19 = vld [vmem:[%s0 + $0x40] sm:$0xff]
  %v20 = vld [vmem:[%s0 + $0x48] sm:$0xff]
  %v21 = vld [vmem:[%s0 + $0x50] sm:$0xff]
  %v22 = vld [vmem:[%s0 + $0x58] sm:$0xff]
  %v23 = vld [vmem:[%s0 + $0x60] sm:$0xff]
  %v24 = vld [vmem:[%s0 + $0x68] sm:$0xff]
  %v25 = vld [vmem:[%s0 + $0x70] sm:$0xff]
  %v26 = vld [vmem:[%s0 + $0x78] sm:$0xff]
  %v27 = vld [vmem:[%s0 + $0x80] sm:$0xff]
  %v28 = vld [vmem:[%s0 + $0x88] sm:$0xff]
  %v29 = vld [vmem:[%s0 + $0x90] sm:$0xff]
  %v30 = vld [vmem:[%s0 + $0x98] sm:$0xff]
  %v31 = vld [vmem:[%s0 + $0xa0] sm:$0xff]
  %v32 = vld [vmem:[%s0 + $0xa8] sm:$0xff]
  %v33 = vld [vmem:[%s0 + $0xb0] sm:$0xff]
  %v34 = vld [vmem:[%s0 + $0xb8] sm:$0xff]
  %v35 = vld [vmem:[%s0 + $0xc0] sm:$0xff]
  %v36 = vld [vmem:[%s0 + $0xc8] sm:$0xff]
  %v37 = vld [vmem:[%s0 + $0xd0] sm:$0xff]
  %v38 = vld [vmem:[%s0 + $0xd8] sm:$0xff]
  %v39 = vld [vmem:[%s0 + $0xe0] sm:$0xff]
  %v40 = vld [vmem:[%s0 + $0xe8] sm:$0xff]
  %v41 = vld [vmem:[%s0 + $0xf0] sm:$0xff]
  %v42 = vld [vmem:[%s0 + $0xf8] sm:$0xff]
  %v43 = vld [vmem:[%s1] sm:$0xff]
  %v44 = vld [vmem:[%s1 + $0x8] sm:$0xff]
  %v45 = vld [vmem:[%s1 + $0x10] sm:$0xff]
  %v46 = vld [vmem:[%s1 + $0x18] sm:$0xff]
  %v47 = vld [vmem:[%s1 + $0x20] sm:$0xff]
  %v48 = vld [vmem:[%s1 + $0x28] sm:$0xff]
  %v49 = vld [vmem:[%s1 + $0x30] sm:$0xff]
  %v50 = vld [vmem:[%s1 + $0x38] sm:$0xff]
  %v51 = vld [vmem:[%s1 + $0x40] sm:$0xff]
  %v52 = vld [vmem:[%s1 + $0x48] sm:$0xff]
  %v53 = vld [vmem:[%s1 + $0x50] sm:$0xff]
  %v54 = vld [vmem:[%s1 + $0x58] sm:$0xff]
  %v55 = vld [vmem:[%s1 + $0x60] sm:$0xff]
  %v56 = vld [vmem:[%s1 + $0x68] sm:$0xff]
  %v57 = vld [vmem:[%s1 + $0x70] sm:$0xff]
  %v58 = vld [vmem:[%s1 + $0x78] sm:$0xff]
  %59 = vmatpush.msra.mxu0 %v58
  %60 = vmatpush.msra.mxu0 %v57
  %61 = vmatpush.msra.mxu0 %v56
  %62 = vmatpush.msra.mxu0 %v55
  %63 = vmatpush.msra.mxu0 %v54
  %64 = vmatpush.msra.mxu0 %v53
  %65 = vmatpush.msra.mxu0 %v52
  %66 = vmatpush.msra.mxu0 %v51
  %67 = vmatpush.msra.mxu0 %v50
  %68 = vmatpush.msra.mxu0 %v49
  %69 = vmatpush.msra.mxu0 %v48
  %70 = vmatpush.msra.mxu0 %v47
  %71 = vmatpush.msra.mxu0 %v46
  %72 = vmatpush.msra.mxu0 %v45
  %73 = vmatpush.msra.mxu0 %v44
  %74 = vmatpush.msra.mxu0 %v43
  %75 = vmatmul.f32.gmra.mxu0 %v11
  %v76 = vpop.f32.mrf.mxu0
  %v77 = vadd.f32 0.0, %v76
  %78 = vmatmul.f32.gmra.mxu0 %v12
  %v79 = vpop.f32.mrf.mxu0
  %v80 = vadd.f32 0.0, %v79
  %81 = vmatmul.f32.gmra.mxu0 %v13
  %v82 = vpop.f32.mrf.mxu0
  %v83 = vadd.f32 0.0, %v82
  %84 = vmatmul.f32.gmra.mxu0 %v14
  %v85 = vpop.f32.mrf.mxu0
  %v86 = vadd.f32 0.0, %v85
  %87 = vmatmul.f32.gmra.mxu0 %v15
  %v88 = vpop.f32.mrf.mxu0
  %v89 = vadd.f32 0.0, %v88
  %90 = vmatmul.f32.gmra.mxu0 %v16
  %v91 = vpop.f32.mrf.mxu0
  %v92 = vadd.f32 0.0, %v91
  %93 = vmatmul.f32.gmra.mxu0 %v17
  %v94 = vpop.f32.mrf.mxu0
  %v95 = vadd.f32 0.0, %v94
  %96 = vmatmul.f32.gmra.mxu0 %v18
  %v97 = vpop.f32.mrf.mxu0
  %v98 = vadd.f32 0.0, %v97
  %99 = vmatmul.f32.gmra.mxu0 %v19
  %v100 = vpop.f32.mrf.mxu0
  %v101 = vadd.f32 0.0, %v100
  %102 = vmatmul.f32.gmra.mxu0 %v20
  %v103 = vpop.f32.mrf.mxu0
  %v104 = vadd.f32 0.0, %v103
  %105 = vmatmul.f32.gmra.mxu0 %v21
  %v106 = vpop.f32.mrf.mxu0
  %v107 = vadd.f32 0.0, %v106
  %108 = vmatmul.f32.gmra.mxu0 %v22
  %v109 = vpop.f32.mrf.mxu0
  %v110 = vadd.f32 0.0, %v109
  %111 = vmatmul.f32.gmra.mxu0 %v23
  %v112 = vpop.f32.mrf.mxu0
  %v113 = vadd.f32 0.0, %v112
  %114 = vmatmul.f32.gmra.mxu0 %v24
  %v115 = vpop.f32.mrf.mxu0
  %v116 = vadd.f32 0.0, %v115
  %117 = vmatmul.f32.gmra.mxu0 %v25
  %v118 = vpop.f32.mrf.mxu0
  %v119 = vadd.f32 0.0, %v118
  %120 = vmatmul.f32.gmra.mxu0 %v26
  %v121 = vpop.f32.mrf.mxu0
  %v122 = vadd.f32 0.0, %v121
  %123 = vmatmul.f32.gmra.mxu0 %v27
  %v124 = vpop.f32.mrf.mxu0
  %v125 = vadd.f32 0.0, %v124
  %126 = vmatmul.f32.gmra.mxu0 %v28
  %v127 = vpop.f32.mrf.mxu0
  %v128 = vadd.f32 0.0, %v127
  %129 = vmatmul.f32.gmra.mxu0 %v29
  %v130 = vpop.f32.mrf.mxu0
  %v131 = vadd.f32 0.0, %v130
  %132 = vmatmul.f32.gmra.mxu0 %v30
  %v133 = vpop.f32.mrf.mxu0
  %v134 = vadd.f32 0.0, %v133
  %135 = vmatmul.f32.gmra.mxu0 %v31
  %v136 = vpop.f32.mrf.mxu0
  %v137 = vadd.f32 0.0, %v136
  %138 = vmatmul.f32.gmra.mxu0 %v32
  %v139 = vpop.f32.mrf.mxu0
  %v140 = vadd.f32 0.0, %v139
  %141 = vmatmul.f32.gmra.mxu0 %v33
  %v142 = vpop.f32.mrf.mxu0
  %v143 = vadd.f32 0.0, %v142
  %144 = vmatmul.f32.gmra.mxu0 %v34
  %v145 = vpop.f32.mrf.mxu0
  %v146 = vadd.f32 0.0, %v145
  %147 = vmatmul.f32.gmra.mxu0 %v35
  %v148 = vpop.f32.mrf.mxu0
  %v149 = vadd.f32 0.0, %v148
  %150 = vmatmul.f32.gmra.mxu0 %v36
  %v151 = vpop.f32.mrf.mxu0
  %v152 = vadd.f32 0.0, %v151
  %153 = vmatmul.f32.gmra.mxu0 %v37
  %v154 = vpop.f32.mrf.mxu0
  %v155 = vadd.f32 0.0, %v154
  %156 = vmatmul.f32.gmra.mxu0 %v38
  %v157 = vpop.f32.mrf.mxu0
  %v158 = vadd.f32 0.0, %v157
  %159 = vmatmul.f32.gmra.mxu0 %v39
  %v160 = vpop.f32.mrf.mxu0
  %v161 = vadd.f32 0.0, %v160
  %162 = vmatmul.f32.gmra.mxu0 %v40
  %v163 = vpop.f32.mrf.mxu0
  %v164 = vadd.f32 0.0, %v163
  %165 = vmatmul.f32.gmra.mxu0 %v41
  %v166 = vpop.f32.mrf.mxu0
  %v167 = vadd.f32 0.0, %v166
  %168 = vmatmul.f32.gmra.mxu0 %v42
  %v169 = vpop.f32.mrf.mxu0
  %v170 = vadd.f32 0.0, %v169
  %171 = vdwg.mxu0
  %v172 = vpack.c.bf16 %v77, %v77
  %v173 = vpack.c.bf16 %v80, %v80
  %v174 = vpack.c.bf16 %v83, %v83
  %v175 = vpack.c.bf16 %v86, %v86
  %v176 = vpack.c.bf16 %v89, %v89
  %v177 = vpack.c.bf16 %v92, %v92
  %v178 = vpack.c.bf16 %v95, %v95
  %v179 = vpack.c.bf16 %v98, %v98
  %v180 = vpack.c.bf16 %v101, %v101
  %v181 = vpack.c.bf16 %v104, %v104
  %v182 = vpack.c.bf16 %v107, %v107
  %v183 = vpack.c.bf16 %v110, %v110
  %v184 = vpack.c.bf16 %v113, %v113
  %v185 = vpack.c.bf16 %v116, %v116
  %v186 = vpack.c.bf16 %v119, %v119
  %v187 = vpack.c.bf16 %v122, %v122
  %v188 = vpack.c.bf16 %v125, %v125
  %v189 = vpack.c.bf16 %v128, %v128
  %v190 = vpack.c.bf16 %v131, %v131
  %v191 = vpack.c.bf16 %v134, %v134
  %v192 = vpack.c.bf16 %v137, %v137
  %v193 = vpack.c.bf16 %v140, %v140
  %v194 = vpack.c.bf16 %v143, %v143
  %v195 = vpack.c.bf16 %v146, %v146
  %v196 = vpack.c.bf16 %v149, %v149
  %v197 = vpack.c.bf16 %v152, %v152
  %v198 = vpack.c.bf16 %v155, %v155
  %v199 = vpack.c.bf16 %v158, %v158
  %v200 = vpack.c.bf16 %v161, %v161
  %v201 = vpack.c.bf16 %v164, %v164
  %v202 = vpack.c.bf16 %v167, %v167
  %v203 = vpack.c.bf16 %v170, %v170
  %204 = vst [vmem:[%s2] sm:$0xf] %v172
  %205 = vst [vmem:[%s2 + $0x4] sm:$0xf] %v173
  %206 = vst [vmem:[%s2 + $0x8] sm:$0xf] %v174
  %207 = vst [vmem:[%s2 + $0xc] sm:$0xf] %v175
  %208 = vst [vmem:[%s2 + $0x10] sm:$0xf] %v176
  %209 = vst [vmem:[%s2 + $0x14] sm:$0xf] %v177
  %210 = vst [vmem:[%s2 + $0x18] sm:$0xf] %v178
  %211 = vst [vmem:[%s2 + $0x1c] sm:$0xf] %v179
  %212 = vst [vmem:[%s2 + $0x20] sm:$0xf] %v180
  %213 = vst [vmem:[%s2 + $0x24] sm:$0xf] %v181
  %214 = vst [vmem:[%s2 + $0x28] sm:$0xf] %v182
  %215 = vst [vmem:[%s2 + $0x2c] sm:$0xf] %v183
  %216 = vst [vmem:[%s2 + $0x30] sm:$0xf] %v184
  %217 = vst [vmem:[%s2 + $0x34] sm:$0xf] %v185
  %218 = vst [vmem:[%s2 + $0x38] sm:$0xf] %v186
  %219 = vst [vmem:[%s2 + $0x3c] sm:$0xf] %v187
  %220 = vst [vmem:[%s2 + $0x40] sm:$0xf] %v188
  %221 = vst [vmem:[%s2 + $0x44] sm:$0xf] %v189
  %222 = vst [vmem:[%s2 + $0x48] sm:$0xf] %v190
  %223 = vst [vmem:[%s2 + $0x4c] sm:$0xf] %v191
  %224 = vst [vmem:[%s2 + $0x50] sm:$0xf] %v192
  %225 = vst [vmem:[%s2 + $0x54] sm:$0xf] %v193
  %226 = vst [vmem:[%s2 + $0x58] sm:$0xf] %v194
  %227 = vst [vmem:[%s2 + $0x5c] sm:$0xf] %v195
  %228 = vst [vmem:[%s2 + $0x60] sm:$0xf] %v196
  %229 = vst [vmem:[%s2 + $0x64] sm:$0xf] %v197
  %230 = vst [vmem:[%s2 + $0x68] sm:$0xf] %v198
  %231 = vst [vmem:[%s2 + $0x6c] sm:$0xf] %v199
  %232 = vst [vmem:[%s2 + $0x70] sm:$0xf] %v200
  %233 = vst [vmem:[%s2 + $0x74] sm:$0xf] %v201
  %234 = vst [vmem:[%s2 + $0x78] sm:$0xf] %v202
  %235 = vst [vmem:[%s2 + $0x7c] sm:$0xf] %v203
  // Predicated region
  $region10: #{dense_gcn_conv.2} parent=0 // pred_check
    _
  $region11: #{dense_gcn_conv.2} parent=0 // pred_check_branch
    %237 = sbr.rel (0) target = $region13
  $region12: #{dense_gcn_conv.2} parent=0 // pred_region
    _
  $region13: #{dense_gcn_conv.2} parent=0 // pred_fallthru
    _
  // Predicated region
  $region14: #{dense_gcn_conv.2} parent=0 // pred_check
    _
  $region15: #{dense_gcn_conv.2} parent=0 // pred_check_branch
    %239 = sbr.rel (0) target = $region17
  $region16: #{dense_gcn_conv.2} parent=0 // pred_region
    _
  $region17: #{dense_gcn_conv.2} parent=0 // pred_fallthru
    _

</llo_original>
